<compile_context>
chip_gen: v7x
topology: tpu7x:2x2x1
jax: 0.10.0
libtpu: 0.0.40
codegen_flags: <defaults>
</compile_context>

<pallas_src>
import functools

import numpy as np
import jax
import jax.numpy as jnp
from jax import lax
from jax.experimental import pallas as pl
from jax.experimental.pallas import tpu as pltpu


def _refine_residual_kernel(x_ref, w1_ref, wc_ref, shift_ref, wr_ref, o_ref,
                            *, ksize, has_relu):
    """NB batch images per grid step, lane-flattened (W, C) layout.

    x_ref:     (NB, H, W*Cin)       bf16
    w1_ref:    (W*Cin, W*Cout)      bf16  block-diagonal 1x1-conv band
    wc_ref:    (K*W*Cout, W*Cout)   bf16  ky-stacked cbr band (BN scale folded in)
    shift_ref: (1, W*Cout)          f32   folded BN shift (tiled over W)
    wr_ref:    (K*W*Cout, W*Cout)   bf16  ky-stacked refine band
    o_ref:     (NB, H, W*Cout)      f32
    """
    NB, H, WCin = x_ref.shape
    WCout = o_ref.shape[2]
    K = ksize
    P = K // 2
    HP = H + P                      # per-image row stride in the stacked image
    Ht = NB * H + (NB - 1) * P      # stacked height (P zero rows between imgs)

    # ---- stack NB images along the matmul M axis (zero separator rows) -----
    if NB == 1:
        x_tall = x_ref[0]
    else:
        sep = jnp.zeros((P, WCin), x_ref.dtype)
        parts = []
        for i in range(NB):
            parts.append(x_ref[i])
            if i + 1 < NB:
                parts.append(sep)
        x_tall = jnp.concatenate(parts, axis=0)               # (Ht, W*Cin) bf16

    # ---- conv_1x1: one lane-dense MXU matmul (bf16 operands, f32 acc) ------
    # Separator rows stay exactly zero (no bias term).
    y1 = jnp.dot(x_tall, w1_ref[...],
                 preferred_element_type=jnp.float32)          # (Ht, WCout) f32

    def conv_kxk(inp_bf16, band_ref):
        # SAME KxK conv as a single deep contraction: lane-concatenate the K
        # row-shifted windows -> one (Ht, K*WCout) @ (K*WCout, WCout) matmul.
        # (kx taps + channel contraction live inside the banded weight; the ky
        #  taps are the stacked row blocks of band_ref.)
        halo = jnp.zeros((P, WCout), jnp.bfloat16)
        padded = jnp.concatenate([halo, inp_bf16, halo], axis=0)  # (Ht+2P, WCout)
        windows = jnp.concatenate(
            [padded[ky:ky + Ht, :] for ky in range(K)], axis=1)   # (Ht, K*WCout)
        # TODO(synk): for large row tiles build the shifted windows with
        # pltpu.roll (idle XLU slot) instead of sublane-misaligned copies.
        return jnp.dot(windows, band_ref[...],
                       preferred_element_type=jnp.float32)        # (Ht, WCout)

    # ---- cbr: KxK conv (BN scale already folded into band) + shift + ReLU --
    t = conv_kxk(y1.astype(jnp.bfloat16), wc_ref)
    t = jnp.maximum(t + shift_ref[...], 0.0)
    if NB > 1:
        # Separator rows picked up image-edge garbage (+ shift) above; re-zero
        # them so they act as the zero SAME-halo of the refine conv.
        row = lax.broadcasted_iota(jnp.int32, (Ht, 1), 0)
        keep = row < H
        for i in range(1, NB):
            keep = keep | ((row >= i * HP) & (row < i * HP + H))
        t = jnp.where(keep, t, 0.0)

    # ---- conv_refine: KxK conv, then residual add with the 1x1 branch ------
    out = conv_kxk(t.astype(jnp.bfloat16), wr_ref) + y1
    if has_relu:
        out = jnp.maximum(out, 0.0)

    # Un-stack: image i occupies stacked rows [i*HP, i*HP + H).
    for i in range(NB):
        o_ref[i] = out[i * HP:i * HP + H, :].astype(o_ref.dtype)


def _banded_conv_weight(w_hwio, width):
    """(K, K, Cin, Cout) HWIO -> (K, width*Cin, width*Cout) banded matrices.

    band[ky][wi*Cin:(wi+1)*Cin, wo*Cout:(wo+1)*Cout] = w[ky, wi - wo + P]
    (zero when |wi - wo| > P), which fuses the kx taps and the channel
    contraction of a SAME conv into one lane-dense matmul per ky tap.
    """
    w = np.asarray(w_hwio, np.float32)
    K, _, ci, co = w.shape
    P = K // 2
    band = np.zeros((K, width * ci, width * co), np.float32)
    for ky in range(K):
        for wo in range(width):
            for kx in range(K):
                wi = wo + kx - P
                if 0 <= wi < width:
                    band[ky, wi * ci:(wi + 1) * ci,
                         wo * co:(wo + 1) * co] = w[ky, kx]
    return band


def _default_images_per_block(n):
    """Whole batch per grid step on single-TC chips (v5e/v6e); keep >=2
    'parallel' grid steps on dual-TC chips (v7x) so both TensorCores work."""
    try:
        kind = jax.devices()[0].device_kind.lower()
    except Exception:  # pragma: no cover
        kind = ""
    target_steps = 2 if "v7" in kind else 1
    nb = max(1, n // target_steps)
    while n % nb:                 # largest divisor of n not exceeding target
        nb -= 1
    return nb


def refine_residual(x_nhwc, w1, wc, bn_scale, bn_shift, wr, *, ksize,
                    has_relu=False, images_per_block=None):
    """x_nhwc (N,H,W,Cin) f32; w1 (Cin,Cout); wc/wr (K,K,Cout,Cout) HWIO;
    bn_scale/bn_shift (Cout,) folded eval-mode BatchNorm."""
    N, H, W, Cin = x_nhwc.shape
    Cout = w1.shape[1]
    K = ksize
    assert K % 2 == 1, "banded SAME-conv construction assumes odd ksize"
    if images_per_block is None:
        images_per_block = _default_images_per_block(N)
    NB = images_per_block
    assert N % NB == 0

    # ---- host-side prep: lane-dense flattening + bf16 MXU operands ---------
    x_flat = x_nhwc.reshape(N, H, W * Cin).astype(jnp.bfloat16)
    w1_band = jnp.asarray(
        _banded_conv_weight(np.asarray(w1).reshape(1, 1, Cin, Cout), W)[0],
        jnp.bfloat16)                                         # (W*Cin, W*Cout)
    # Fold eval-mode BN scale into the cbr conv weight (exact: BN is linear).
    wc_scaled = np.asarray(wc, np.float32) * np.asarray(
        bn_scale, np.float32).reshape(1, 1, 1, Cout)
    # ky-stacked bands: rows [ky*W*Cout:(ky+1)*W*Cout] = band of tap ky.
    wc_band = jnp.asarray(
        _banded_conv_weight(wc_scaled, W).reshape(K * W * Cout, W * Cout),
        jnp.bfloat16)
    wr_band = jnp.asarray(
        _banded_conv_weight(wr, W).reshape(K * W * Cout, W * Cout),
        jnp.bfloat16)
    shift_flat = jnp.tile(jnp.asarray(bn_shift, jnp.float32).reshape(-1),
                          W).reshape(1, W * Cout)

    kernel = functools.partial(_refine_residual_kernel, ksize=K,
                               has_relu=has_relu)
    # TODO(synk): production H,W: tile H in multiples of 8 sublanes with a
    # (K-1)-row halo (target 256-512 rows/tile), single-buffer the grid-
    # invariant band weights (pipeline_mode=pl.Buffered(1)), size tiles against
    # v7x's 64 MiB VMEM, and cap the flattened lane axis at ~128-256 (block-
    # banded weights / per-kx matmuls) to avoid the O((W*C)^2) band FLOP
    # blow-up.  Output could be emitted as bf16 if downstream accepts it.
    grid = (N // NB,)
    out_flat = pl.pallas_call(
        kernel,
        out_shape=jax.ShapeDtypeStruct((N, H, W * Cout), jnp.float32),
        grid_spec=pltpu.PrefetchScalarGridSpec(
            num_scalar_prefetch=0,
            grid=grid,
            in_specs=[
                pl.BlockSpec((NB, H, W * Cin), lambda n: (n, 0, 0)),
                pl.BlockSpec((W * Cin, W * Cout), lambda n: (0, 0)),
                pl.BlockSpec((K * W * Cout, W * Cout), lambda n: (0, 0)),
                pl.BlockSpec((1, W * Cout), lambda n: (0, 0)),
                pl.BlockSpec((K * W * Cout, W * Cout), lambda n: (0, 0)),
            ],
            out_specs=pl.BlockSpec((NB, H, W * Cout), lambda n: (n, 0, 0)),
        ),
        compiler_params=pltpu.CompilerParams(
            dimension_semantics=("parallel",),   # batch steps across TCs (v7x)
            vmem_limit_bytes=32 * 1024 * 1024),
    )(x_flat, w1_band, wc_band, shift_flat, wr_band)
    return out_flat.reshape(N, H, W, Cout)


def reference(x_nhwc, w1, wc, bn_scale, bn_shift, wr, *, has_relu=False):
    dn = ('NHWC', 'HWIO', 'NHWC')

    def conv(x, w, pad):
        # Same numerics as the kernel: bf16 operands, f32 accumulation.
        return lax.conv_general_dilated(
            x.astype(jnp.bfloat16), w.astype(jnp.bfloat16), (1, 1), pad,
            dimension_numbers=dn, preferred_element_type=jnp.float32)

    y1 = conv(x_nhwc, w1.reshape(1, 1, *w1.shape), 'VALID')
    # Eval-mode BN folded the same way as the kernel (scale into the conv
    # weight, exact since BN is linear; shift applied after).
    t = conv(y1, wc * bn_scale.reshape(1, 1, 1, -1), 'SAME')
    t = jnp.maximum(t + bn_shift.reshape(1, 1, 1, -1), 0.0)
    t = conv(t, wr, 'SAME')
    out = t + y1
    if has_relu:
        out = jnp.maximum(out, 0.0)
    return out


if __name__ == "__main__":
    # Small shapes consistent with the module: N=2, Cin=4, Cout=8, H=W=16, K=3.
    N, Cin, Cout, H, W, K = 2, 4, 8, 16, 16, 3
    bn_eps = 1e-5
    has_relu = False          # module default

    key = jax.random.PRNGKey(0)
    kx, k1, k2, k3, kg, kb = jax.random.split(key, 6)

    x_nchw = jax.random.normal(kx, (N, Cin, H, W), jnp.float32)  # PyTorch layout
    x_nhwc = jnp.transpose(x_nchw, (0, 2, 3, 1))                 # kernel layout

    # Deterministic synthetic parameters (no bias: has_bias=False default).
    w1 = 0.1 * jax.random.normal(k1, (Cin, Cout), jnp.float32)         # 1x1
    wc = 0.1 * jax.random.normal(k2, (K, K, Cout, Cout), jnp.float32)  # HWIO
    wr = 0.1 * jax.random.normal(k3, (K, K, Cout, Cout), jnp.float32)  # HWIO

    # BatchNorm (eval-mode): fold gamma/beta/running stats into scale/shift.
    gamma = 1.0 + 0.1 * jax.random.normal(kg, (Cout,), jnp.float32)
    beta = 0.1 * jax.random.normal(kb, (Cout,), jnp.float32)
    run_mean = jnp.zeros((Cout,), jnp.float32)
    run_var = jnp.ones((Cout,), jnp.float32)
    bn_scale = gamma / jnp.sqrt(run_var + bn_eps)
    bn_shift = beta - run_mean * bn_scale

    out = refine_residual(x_nhwc, w1, wc, bn_scale, bn_shift, wr,
                          ksize=K, has_relu=has_relu)
    out = jax.block_until_ready(out)

    ref = reference(x_nhwc, w1, wc, bn_scale, bn_shift, wr, has_relu=has_relu)
    assert out.shape == (N, H, W, Cout)
    max_err = float(jnp.max(jnp.abs(out - ref)))
    assert jnp.allclose(out, ref, atol=1e-3, rtol=1e-3), max_err

    print("KERNEL_OK")
</pallas_src>

<mosaic_0001>
module attributes {stable_mosaic.version = 11 : i64} {
  func.func @_refine_residual_kernel(%arg0: i32, %arg1: memref<2x16x64xbf16, #tpu.memory_space<vmem>>, %arg2: memref<64x128xbf16, #tpu.memory_space<vmem>>, %arg3: memref<384x128xbf16, #tpu.memory_space<vmem>>, %arg4: memref<1x128xf32, #tpu.memory_space<vmem>>, %arg5: memref<384x128xbf16, #tpu.memory_space<vmem>>, %arg6: memref<2x16x128xf32, #tpu.memory_space<vmem>>) attributes {dimension_semantics = [#tpu.dimension_semantics<parallel>], iteration_bounds = array<i64: 1>, scalar_prefetch = 0 : i64, scratch_operands = 0 : i64, tpu.core_type = #tpu.core_type<tc>, window_params = [{transform_indices = @transform_0, window_bounds = array<i64: 2, 16, 64>}, {pipeline_mode = #tpu.pipeline_mode<synchronous>, transform_indices = @transform_1, window_bounds = array<i64: 64, 128>}, {pipeline_mode = #tpu.pipeline_mode<synchronous>, transform_indices = @transform_2, window_bounds = array<i64: 384, 128>}, {pipeline_mode = #tpu.pipeline_mode<synchronous>, transform_indices = @transform_3, window_bounds = array<i64: 1, 128>}, {pipeline_mode = #tpu.pipeline_mode<synchronous>, transform_indices = @transform_4, window_bounds = array<i64: 384, 128>}, {transform_indices = @transform_5, window_bounds = array<i64: 2, 16, 128>}]} {
    %cst = arith.constant 0.000000e+00 : bf16
    %0 = vector.broadcast %cst : bf16 to vector<1x64xbf16>
    %c0 = arith.constant 0 : index
    %c0_0 = arith.constant 0 : index
    %c0_1 = arith.constant 0 : index
    %1 = vector.load %arg1[%c0, %c0_0, %c0_1] : memref<2x16x64xbf16, #tpu.memory_space<vmem>>, vector<1x16x64xbf16>
    %2 = vector.shape_cast %1 : vector<1x16x64xbf16> to vector<16x64xbf16>
    %c1 = arith.constant 1 : index
    %c0_2 = arith.constant 0 : index
    %c0_3 = arith.constant 0 : index
    %3 = vector.load %arg1[%c1, %c0_2, %c0_3] : memref<2x16x64xbf16, #tpu.memory_space<vmem>>, vector<1x16x64xbf16>
    %4 = vector.shape_cast %3 : vector<1x16x64xbf16> to vector<16x64xbf16>
    %5 = tpu.concatenate %2, %0, %4 in 0 : vector<16x64xbf16>, vector<1x64xbf16>, vector<16x64xbf16> -> vector<33x64xbf16>
    %c0_4 = arith.constant 0 : index
    %c0_5 = arith.constant 0 : index
    %6 = vector.load %arg2[%c0_4, %c0_5] : memref<64x128xbf16, #tpu.memory_space<vmem>>, vector<64x128xbf16>
    %cst_6 = arith.constant dense<0.000000e+00> : vector<33x128xf32>
    %7 = tpu.matmul %5, %6, %cst_6 {dimension_numbers = #tpu.dot_dimension_numbers<[1], [0], [0], [1], [0, 0, 1, 1], [], []>} : vector<33x64xbf16>, vector<64x128xbf16>, vector<33x128xf32> -> vector<33x128xf32>
    %8 = arith.truncf %7 : vector<33x128xf32> to vector<33x128xbf16>
    %cst_7 = arith.constant 0.000000e+00 : bf16
    %9 = vector.broadcast %cst_7 : bf16 to vector<1x128xbf16>
    %10 = tpu.concatenate %9, %8, %9 in 0 : vector<1x128xbf16>, vector<33x128xbf16>, vector<1x128xbf16> -> vector<35x128xbf16>
    %11 = vector.extract_strided_slice %10 {offsets = [0, 0], sizes = [33, 128], strides = [1, 1]} : vector<35x128xbf16> to vector<33x128xbf16>
    %12 = vector.extract_strided_slice %10 {offsets = [1, 0], sizes = [33, 128], strides = [1, 1]} : vector<35x128xbf16> to vector<33x128xbf16>
    %13 = vector.extract_strided_slice %10 {offsets = [2, 0], sizes = [33, 128], strides = [1, 1]} : vector<35x128xbf16> to vector<33x128xbf16>
    %14 = tpu.concatenate %11, %12, %13 in 1 : vector<33x128xbf16>, vector<33x128xbf16>, vector<33x128xbf16> -> vector<33x384xbf16>
    %c0_8 = arith.constant 0 : index
    %c0_9 = arith.constant 0 : index
    %15 = vector.load %arg3[%c0_8, %c0_9] : memref<384x128xbf16, #tpu.memory_space<vmem>>, vector<384x128xbf16>
    %cst_10 = arith.constant dense<0.000000e+00> : vector<33x128xf32>
    %16 = tpu.matmul %14, %15, %cst_10 {dimension_numbers = #tpu.dot_dimension_numbers<[1], [0], [0], [1], [0, 0, 1, 1], [], []>} : vector<33x384xbf16>, vector<384x128xbf16>, vector<33x128xf32> -> vector<33x128xf32>
    %c0_11 = arith.constant 0 : index
    %c0_12 = arith.constant 0 : index
    %17 = vector.load %arg4[%c0_11, %c0_12] : memref<1x128xf32, #tpu.memory_space<vmem>>, vector<1x128xf32>
    %18 = vector.broadcast %17 : vector<1x128xf32> to vector<33x128xf32>
    %19 = arith.addf %16, %18 : vector<33x128xf32>
    %cst_13 = arith.constant 0.000000e+00 : f32
    %20 = vector.broadcast %cst_13 : f32 to vector<33x128xf32>
    %21 = arith.maximumf %19, %20 : vector<33x128xf32>
    %22 = tpu.iota {dimensions = array<i32: 0>} : vector<33x1xi32>
    %c16_i32 = arith.constant 16 : i32
    %23 = vector.broadcast %c16_i32 : i32 to vector<33x1xi32>
    %24 = arith.cmpi slt, %22, %23 : vector<33x1xi32>
    %c17_i32 = arith.constant 17 : i32
    %25 = vector.broadcast %c17_i32 : i32 to vector<33x1xi32>
    %26 = arith.cmpi sge, %22, %25 : vector<33x1xi32>
    %c33_i32 = arith.constant 33 : i32
    %27 = vector.broadcast %c33_i32 : i32 to vector<33x1xi32>
    %28 = arith.cmpi slt, %22, %27 : vector<33x1xi32>
    %29 = arith.andi %26, %28 : vector<33x1xi1>
    %30 = arith.ori %24, %29 : vector<33x1xi1>
    %cst_14 = arith.constant 0.000000e+00 : f32
    %31 = vector.shape_cast %30 : vector<33x1xi1> to vector<33x1xi1>
    %32 = vector.broadcast %31 : vector<33x1xi1> to vector<33x128xi1>
    %33 = vector.broadcast %cst_14 : f32 to vector<33x128xf32>
    %34 = arith.select %32, %21, %33 : vector<33x128xi1>, vector<33x128xf32>
    %35 = arith.truncf %34 : vector<33x128xf32> to vector<33x128xbf16>
    %cst_15 = arith.constant 0.000000e+00 : bf16
    %36 = vector.broadcast %cst_15 : bf16 to vector<1x128xbf16>
    %37 = tpu.concatenate %36, %35, %36 in 0 : vector<1x128xbf16>, vector<33x128xbf16>, vector<1x128xbf16> -> vector<35x128xbf16>
    %38 = vector.extract_strided_slice %37 {offsets = [0, 0], sizes = [33, 128], strides = [1, 1]} : vector<35x128xbf16> to vector<33x128xbf16>
    %39 = vector.extract_strided_slice %37 {offsets = [1, 0], sizes = [33, 128], strides = [1, 1]} : vector<35x128xbf16> to vector<33x128xbf16>
    %40 = vector.extract_strided_slice %37 {offsets = [2, 0], sizes = [33, 128], strides = [1, 1]} : vector<35x128xbf16> to vector<33x128xbf16>
    %41 = tpu.concatenate %38, %39, %40 in 1 : vector<33x128xbf16>, vector<33x128xbf16>, vector<33x128xbf16> -> vector<33x384xbf16>
    %c0_16 = arith.constant 0 : index
    %c0_17 = arith.constant 0 : index
    %42 = vector.load %arg5[%c0_16, %c0_17] : memref<384x128xbf16, #tpu.memory_space<vmem>>, vector<384x128xbf16>
    %cst_18 = arith.constant dense<0.000000e+00> : vector<33x128xf32>
    %43 = tpu.matmul %41, %42, %cst_18 {dimension_numbers = #tpu.dot_dimension_numbers<[1], [0], [0], [1], [0, 0, 1, 1], [], []>} : vector<33x384xbf16>, vector<384x128xbf16>, vector<33x128xf32> -> vector<33x128xf32>
    %44 = arith.addf %43, %7 : vector<33x128xf32>
    %45 = vector.extract_strided_slice %44 {offsets = [0, 0], sizes = [16, 128], strides = [1, 1]} : vector<33x128xf32> to vector<16x128xf32>
    %c0_19 = arith.constant 0 : index
    %c0_20 = arith.constant 0 : index
    %c0_21 = arith.constant 0 : index
    %46 = vector.load %arg6[%c0_19, %c0_20, %c0_21] : memref<2x16x128xf32, #tpu.memory_space<vmem>>, vector<1x16x128xf32>
    %47 = vector.shape_cast %46 : vector<1x16x128xf32> to vector<16x128xf32>
    %48 = vector.shape_cast %45 : vector<16x128xf32> to vector<1x16x128xf32>
    tpu.vector_store %arg6[%c0_19, %c0_20, %c0_21], %48 {strides = array<i32>} : memref<2x16x128xf32, #tpu.memory_space<vmem>>, vector<1x16x128xf32>,
    %49 = vector.extract_strided_slice %44 {offsets = [17, 0], sizes = [16, 128], strides = [1, 1]} : vector<33x128xf32> to vector<16x128xf32>
    %c1_22 = arith.constant 1 : index
    %c0_23 = arith.constant 0 : index
    %c0_24 = arith.constant 0 : index
    %50 = vector.load %arg6[%c1_22, %c0_23, %c0_24] : memref<2x16x128xf32, #tpu.memory_space<vmem>>, vector<1x16x128xf32>
    %51 = vector.shape_cast %50 : vector<1x16x128xf32> to vector<16x128xf32>
    %52 = vector.shape_cast %49 : vector<16x128xf32> to vector<1x16x128xf32>
    tpu.vector_store %arg6[%c1_22, %c0_23, %c0_24], %52 {strides = array<i32>} : memref<2x16x128xf32, #tpu.memory_space<vmem>>, vector<1x16x128xf32>,
    return
  }
  func.func @transform_0(%arg0: i32) -> (i32, i32, i32) {
    %c0_i32 = arith.constant 0 : i32
    %c0_i32_0 = arith.constant 0 : i32
    %c0_i32_1 = arith.constant 0 : i32
    return %arg0, %c0_i32, %c0_i32_0 : i32, i32, i32
  }
  func.func @transform_1(%arg0: i32) -> (i32, i32) {
    %c0_i32 = arith.constant 0 : i32
    %c0_i32_0 = arith.constant 0 : i32
    %c0_i32_1 = arith.constant 0 : i32
    return %c0_i32, %c0_i32_0 : i32, i32
  }
  func.func @transform_2(%arg0: i32) -> (i32, i32) {
    %c0_i32 = arith.constant 0 : i32
    %c0_i32_0 = arith.constant 0 : i32
    %c0_i32_1 = arith.constant 0 : i32
    return %c0_i32, %c0_i32_0 : i32, i32
  }
  func.func @transform_3(%arg0: i32) -> (i32, i32) {
    %c0_i32 = arith.constant 0 : i32
    %c0_i32_0 = arith.constant 0 : i32
    %c0_i32_1 = arith.constant 0 : i32
    return %c0_i32, %c0_i32_0 : i32, i32
  }
  func.func @transform_4(%arg0: i32) -> (i32, i32) {
    %c0_i32 = arith.constant 0 : i32
    %c0_i32_0 = arith.constant 0 : i32
    %c0_i32_1 = arith.constant 0 : i32
    return %c0_i32, %c0_i32_0 : i32, i32
  }
  func.func @transform_5(%arg0: i32) -> (i32, i32, i32) {
    %c0_i32 = arith.constant 0 : i32
    %c0_i32_0 = arith.constant 0 : i32
    %c0_i32_1 = arith.constant 0 : i32
    return %arg0, %c0_i32, %c0_i32_0 : i32, i32, i32
  }
}

</mosaic_0001>

<llo_original>
// kernel: tpu_custom_call.1
$region0: #{tpu_custom_call.1}
  #allocation0 [shape = 'u32[]', space=smem, size = 0x4, offset = 0x4, fixed_abs, tag = 'smem constant byte address 0x4 - core index']
  #allocation1 [shape = 'u32[144,128]{1,0:T(1,128)}', space=vmem, size = 0x12000, scoped, tag = 'internal scratch']
  %s0 = inlined_call_operand.hbm [shape: bf16[2,16,64], index: 0, kind: input, shape index: {}]
  %s1 = inlined_call_operand.hbm [shape: bf16[64,128], index: 1, kind: input, shape index: {}]
  %s2 = inlined_call_operand.hbm [shape: bf16[384,128], index: 2, kind: input, shape index: {}]
  %s3 = inlined_call_operand.vmem [shape: f32[1,128], index: 3, kind: input, shape index: {}]
  %s4 = inlined_call_operand.hbm [shape: bf16[384,128], index: 4, kind: input, shape index: {}]
  %s5 = inlined_call_operand.hbm [shape: f32[2,16,128], index: 5, kind: output, shape index: {}]
  %s6 = sld [smem:[#allocation0]]
  $region46: #{tpu_custom_call.1} parent=0
    _
  %s8 = ssub.s32 1, %s6
  %s9 = scalar_select 0, %s8, %s6
  $region1: #{tpu_custom_call.1} parent=0
    #allocation2 [shape = 'u8[8192]{0}', space=vmem, size = 0x2000, scoped, tag = 'input window, operand 0, single buffered']
    #allocation3 [shape = 's32[1]{0}', space=sflag, size = 0x4, scoped, tag = 'scoped memory for tpu_custom_call.1']
    #allocation4 [shape = 's32[1]{0}', space=sflag, size = 0x4, scoped, tag = 'scoped memory for tpu_custom_call.1']
    #allocation5 [shape = 'u8[16384]{0}', space=vmem, size = 0x4000, scoped, tag = 'input window, operand 1, single buffered']
    #allocation6 [shape = 's32[1]{0}', space=sflag, size = 0x4, scoped, tag = 'scoped memory for tpu_custom_call.1']
    #allocation7 [shape = 'u8[98304]{0}', space=vmem, size = 0x18000, scoped, tag = 'input window, operand 2, single buffered']
    #allocation8 [shape = 'u8[98304]{0}', space=vmem, size = 0x18000, scoped, tag = 'input window, operand 4, single buffered']
    #allocation9 [shape = 's32[1]{0}', space=sflag, size = 0x4, scoped, tag = 'scoped memory for tpu_custom_call.1']
    #allocation10 [shape = 'u8[16384]{0}', space=vmem, size = 0x4000, scoped, tag = 'output window, operand 0, single buffered']
    %10 = vsyncpa [#allocation3], 0
    %11 = vsyncpa [#allocation6], 0
    %12 = vsyncpa [#allocation9], 0
    %13 = vsyncpa [#allocation4], 0
    // Predicated region
    $region2: #{tpu_custom_call.1} parent=1 // pred_check
      _
    $region3: #{tpu_custom_call.1} parent=1 // pred_check_branch
      %15 = sbr.rel (0) target = $region5
    $region4: #{tpu_custom_call.1} parent=1 // pred_region
      %s17 = ssub.s32 256, 256
      %18 = vsyncadd [#allocation3], %s17
      %s19 = sshll.u32 [#allocation2], 4
      %s20 = int_to_ptr.vmem [resolvable:$true] %s19
      %25 = dma.hbm_to_vmem [thread:$0]  %s0, 256, %s20, [#allocation3], 64, 64, 4
    $region5: #{tpu_custom_call.1} parent=1 // pred_fallthru
      _
    // Predicated region
    $region6: #{tpu_custom_call.1} parent=1 // pred_check
      _
    $region7: #{tpu_custom_call.1} parent=1 // pred_check_branch
      %27 = sbr.rel (0) target = $region9
    $region8: #{tpu_custom_call.1} parent=1 // pred_region
      %s29 = ssub.s32 512, 512
      %30 = vsyncadd [#allocation6], %s29
      %s31 = sshll.u32 [#allocation5], 4
      %s32 = int_to_ptr.vmem [resolvable:$true] %s31
      %37 = dma.hbm_to_vmem [thread:$0]  %s1, 512, %s32, [#allocation6], 64, 64, 4
    $region9: #{tpu_custom_call.1} parent=1 // pred_fallthru
      _
    // Predicated region
    $region10: #{tpu_custom_call.1} parent=1 // pred_check
      _
    $region11: #{tpu_custom_call.1} parent=1 // pred_check_branch
      %39 = sbr.rel (0) target = $region13
    $region12: #{tpu_custom_call.1} parent=1 // pred_region
      %s41 = ssub.s32 3072, 3072
      %42 = vsyncadd [#allocation6], %s41
      %s43 = sshll.u32 [#allocation7], 4
      %s44 = int_to_ptr.vmem [resolvable:$true] %s43
      %49 = dma.hbm_to_vmem [thread:$0]  %s2, 3072, %s44, [#allocation6], 64, 64, 4
    $region13: #{tpu_custom_call.1} parent=1 // pred_fallthru
      _
    // Predicated region
    $region14: #{tpu_custom_call.1} parent=1 // pred_check
      _
    $region15: #{tpu_custom_call.1} parent=1 // pred_check_branch
      %51 = sbr.rel (0) target = $region17
    $region16: #{tpu_custom_call.1} parent=1 // pred_region
      _
    $region17: #{tpu_custom_call.1} parent=1 // pred_fallthru
      _
    // Predicated region
    $region18: #{tpu_custom_call.1} parent=1 // pred_check
      _
    $region19: #{tpu_custom_call.1} parent=1 // pred_check_branch
      %53 = sbr.rel (0) target = $region21
    $region20: #{tpu_custom_call.1} parent=1 // pred_region
      %s55 = ssub.s32 3072, 3072
      %56 = vsyncadd [#allocation9], %s55
      %s57 = sshll.u32 [#allocation8], 4
      %s58 = int_to_ptr.vmem [resolvable:$true] %s57
      %63 = dma.hbm_to_vmem [thread:$0]  %s4, 3072, %s58, [#allocation9], 64, 64, 4
    $region21: #{tpu_custom_call.1} parent=1 // pred_fallthru
      _
    // Predicated region
    $region22: #{tpu_custom_call.1} parent=1 // pred_check
      _
    $region23: #{tpu_custom_call.1} parent=1 // pred_check_branch
      %65 = sbr.rel (0) target = $region25
    $region24: #{tpu_custom_call.1} parent=1 // pred_region
      %66 = dma.done [#allocation3], 256
    $region25: #{tpu_custom_call.1} parent=1 // pred_fallthru
      _
    // Predicated region
    $region26: #{tpu_custom_call.1} parent=1 // pred_check
      _
    $region27: #{tpu_custom_call.1} parent=1 // pred_check_branch
      %68 = sbr.rel (0) target = $region29
    $region28: #{tpu_custom_call.1} parent=1 // pred_region
      %69 = dma.done [#allocation6], 512
    $region29: #{tpu_custom_call.1} parent=1 // pred_fallthru
      _
    // Predicated region
    $region30: #{tpu_custom_call.1} parent=1 // pred_check
      _
    $region31: #{tpu_custom_call.1} parent=1 // pred_check_branch
      %71 = sbr.rel (0) target = $region33
    $region32: #{tpu_custom_call.1} parent=1 // pred_region
      %72 = dma.done [#allocation6], 3072
    $region33: #{tpu_custom_call.1} parent=1 // pred_fallthru
      _
    // Predicated region
    $region34: #{tpu_custom_call.1} parent=1 // pred_check
      _
    $region35: #{tpu_custom_call.1} parent=1 // pred_check_branch
      %74 = sbr.rel (0) target = $region37
    $region36: #{tpu_custom_call.1} parent=1 // pred_region
      %75 = dma.done [#allocation9], 3072
    $region37: #{tpu_custom_call.1} parent=1 // pred_fallthru
      _
    %v77 = vld [vmem:[#allocation2] sm:$0xf]
    %v78 = vld [vmem:[#allocation2 + $0x4] sm:$0xf]
    %s79 = scalar_lea.vmem [#allocation2], 8
    %v80 = vld [vmem:[%s79] sm:$0xf]
    %v81 = vld [vmem:[%s79 + $0x4] sm:$0xf]
    %v84 = vunpack.c.l.b16 %v77
    %v85 = vunpack.c.l.b16 %v78
    %v86 = vpack.c.b16 %v85, %v84
    %v89 = vunpack.c.l.b16 %v80
    %v90 = vunpack.c.l.b16 %v81
    %v91 = vpack.c.b16 %v90, %v89
    %v93 = vshrl.u32 %v91, 16
    %v95 = vrot.slane %v93, 7
    %v96 = vshll.u32 %v91, 16
    %v98 = vor.u32 %v95, %v96
    %vm100 = vcmask 1040384
    %vm101 = vsmask.f32 256
    %vm102 = vmand %vm100, %vm101
    %v103 = vsel %vm102, 0, %v98
    %v104 = vld [vmem:[#allocation5] sm:$0xf]
    %v105 = vld [vmem:[#allocation5 + $0x4] sm:$0xf]
    %v106 = vld [vmem:[#allocation5 + $0x8] sm:$0xf]
    %v107 = vld [vmem:[#allocation5 + $0xc] sm:$0xf]
    %v108 = vld [vmem:[#allocation5 + $0x10] sm:$0xf]
    %v109 = vld [vmem:[#allocation5 + $0x14] sm:$0xf]
    %v110 = vld [vmem:[#allocation5 + $0x18] sm:$0xf]
    %v111 = vld [vmem:[#allocation5 + $0x1c] sm:$0xf]
    %v120 = vunpack.c.l.b16 %v104
    %v121 = vunpack.c.l.b16 %v105
    %v122 = vunpack.c.l.b16 %v106
    %v123 = vunpack.c.l.b16 %v107
    %v124 = vunpack.c.l.b16 %v108
    %v125 = vunpack.c.l.b16 %v109
    %v126 = vunpack.c.l.b16 %v110
    %v127 = vunpack.c.l.b16 %v111
    %v128 = vpack.c.b16 %v121, %v120
    %v129 = vpack.c.b16 %v123, %v122
    %v130 = vpack.c.b16 %v125, %v124
    %v131 = vpack.c.b16 %v127, %v126
    %vm136 = vcmask 523264
    %v138 = vsel %vm136, %v86, 0
    %v141 = vsel %vm136, %v103, 0
    %v144 = vsel %vm136, %v95, 0
    %146 = vmatprep.subr.bf16.mxu0 0
    %147 = vmatpush1.bf16.msra.mxu0 %v128
    %148 = vmatprep.subr.bf16.mxu0 0
    %149 = vmatpush1.bf16.msra.mxu0 %v129
    %150 = vmatprep.subr.bf16.mxu0 0
    %151 = vmatpush1.bf16.msra.mxu0 %v130
    %152 = vmatprep.subr.bf16.mxu0 0
    %153 = vmatpush1.bf16.msra.mxu0 %v131
    %154 = vmatprep.subr.bf16.mxu0 0
    %155 = vmatpush1.bf16.msra.mxu0 0
    %156 = vmatprep.subr.bf16.mxu0 0
    %157 = vmatpush1.bf16.msra.mxu0 0
    %158 = vmatprep.subr.bf16.mxu0 0
    %159 = vmatpush1.bf16.msra.mxu0 0
    %160 = vmatprep.subr.bf16.mxu0 0
    %161 = vmatpush1.bf16.msra.mxu0 0
    %162 = vmatprep.subr.bf16.mxu0 0
    %163 = vmatpush1.bf16.msra.mxu0 0
    %164 = vmatprep.subr.bf16.mxu0 0
    %165 = vmatpush1.bf16.msra.mxu0 0
    %166 = vmatprep.subr.bf16.mxu0 0
    %167 = vmatpush1.bf16.msra.mxu0 0
    %168 = vmatprep.subr.bf16.mxu0 0
    %169 = vmatpush1.bf16.msra.mxu0 0
    %170 = vmatprep.subr.bf16.mxu0 0
    %171 = vmatpush1.bf16.msra.mxu0 0
    %172 = vmatprep.subr.bf16.mxu0 0
    %173 = vmatpush1.bf16.msra.mxu0 0
    %174 = vmatprep.subr.bf16.mxu0 0
    %175 = vmatpush1.bf16.msra.mxu0 0
    %176 = vmatprep.subr.bf16.mxu0 0
    %177 = vmatpush1.bf16.msra.mxu0 0
    %178 = vmatprep.mubr.bf16.mxu0 0
    %179 = vmatmul.mubr.bf16.gmra.mrb[0].mxu0 %v138
    %v180 = vpop.f32.mrb[0].mxu0
    %v181 = vadd.f32 0.0, %v180
    %v182 = vpop.f32.mrb[0].mxu0
    %v183 = vpop.f32.mrb[0].mxu0
    %v184 = vadd.f32 0.0, %v183
    %v185 = vpop.f32.mrb[0].mxu0
    %186 = vmatprep.mubr.bf16.mxu0 0
    %187 = vmatmul.mubr.bf16.gmra.mrb[0].mxu0 %v141
    %v188 = vpop.f32.mrb[0].mxu0
    %v189 = vadd.f32 0.0, %v188
    %v190 = vpop.f32.mrb[0].mxu0
    %v191 = vpop.f32.mrb[0].mxu0
    %v192 = vadd.f32 0.0, %v191
    %v193 = vpop.f32.mrb[0].mxu0
    %194 = vmatprep.mubr.bf16.mxu0 0
    %195 = vmatmul.mubr.bf16.gmra.mrb[0].mxu0 %v144
    %v196 = vpop.f32.mrb[0].mxu0
    %v197 = vadd.f32 0.0, %v196
    %v198 = vpop.f32.mrb[0].mxu0
    %v199 = vpop.f32.mrb[0].mxu0
    %v200 = vpop.f32.mrb[0].mxu0
    %201 = vdwg.mxu0
    %v202 = vpack.c.bf16 %v184, %v181
    %v203 = vpack.c.bf16 %v192, %v189
    %v204 = vpack.c.bf16 %v197, %v197
    %v206 = vshrl.u32 %v202, 16
    %v208 = vrot.slane %v206, 7
    %v209 = vshll.u32 %v202, 16
    %v211 = vor.u32 %v208, %v209
    %v213 = vshrl.u32 %v203, 16
    %v215 = vrot.slane %v213, 7
    %v216 = vshll.u32 %v203, 16
    %v218 = vor.u32 %v215, %v216
    %v219 = vsel %vm101, %v208, %v218
    %v221 = vshll.u32 %v204, 16
    %v223 = vsel %vm101, %v215, %v221
    %v226 = vsel %vm102, 0, %v211
    %vm227 = vcmask 1040384
    %v230 = vsel %vm227, %v223, 0
    %vm232 = vsmask.f32 7424
    %v234 = vshrl.u32 %v226, 16
    %v236 = vshll.u32 %v226, 16
    %v238 = vrot.slane %v236, 1
    %v239 = vor.u32 %v234, %v238
    %v241 = vshll.u32 %v219, 16
    %v243 = vrot.slane %v241, 1
    %v244 = vsel %vm232, %v239, %v243
    %v245 = vshrl.u32 %v219, 16
    %v247 = vor.u32 %v245, %v243
    %v248 = vshll.u32 %v230, 16
    %v250 = vrot.slane %v248, 1
    %v251 = vsel %vm232, %v247, %v250
    %v252 = vshrl.u32 %v230, 16
    %vm259 = vcmask 1046528
    %v260 = vrot.slane %v226, 1
    %v261 = vrot.slane %v219, 1
    %v262 = vsel %vm259, %v260, %v261
    %v263 = vrot.slane %v230, 1
    %v264 = vsel %vm259, %v261, %v263
    %v268 = vld [vmem:[#allocation7] sm:$0xf]
    %v269 = vld [vmem:[#allocation7 + $0x4] sm:$0xf]
    %v270 = vld [vmem:[#allocation7 + $0x8] sm:$0xf]
    %v271 = vld [vmem:[#allocation7 + $0xc] sm:$0xf]
    %v272 = vld [vmem:[#allocation7 + $0x10] sm:$0xf]
    %v273 = vld [vmem:[#allocation7 + $0x14] sm:$0xf]
    %v274 = vld [vmem:[#allocation7 + $0x18] sm:$0xf]
    %v275 = vld [vmem:[#allocation7 + $0x1c] sm:$0xf]
    %v276 = vld [vmem:[#allocation7 + $0x20] sm:$0xf]
    %v277 = vld [vmem:[#allocation7 + $0x24] sm:$0xf]
    %v278 = vld [vmem:[#allocation7 + $0x28] sm:$0xf]
    %v279 = vld [vmem:[#allocation7 + $0x2c] sm:$0xf]
    %v280 = vld [vmem:[#allocation7 + $0x30] sm:$0xf]
    %v281 = vld [vmem:[#allocation7 + $0x34] sm:$0xf]
    %v282 = vld [vmem:[#allocation7 + $0x38] sm:$0xf]
    %v283 = vld [vmem:[#allocation7 + $0x3c] sm:$0xf]
    %v284 = vld [vmem:[#allocation7 + $0x40] sm:$0xf]
    %v285 = vld [vmem:[#allocation7 + $0x44] sm:$0xf]
    %v286 = vld [vmem:[#allocation7 + $0x48] sm:$0xf]
    %v287 = vld [vmem:[#allocation7 + $0x4c] sm:$0xf]
    %v288 = vld [vmem:[#allocation7 + $0x50] sm:$0xf]
    %v289 = vld [vmem:[#allocation7 + $0x54] sm:$0xf]
    %v290 = vld [vmem:[#allocation7 + $0x58] sm:$0xf]
    %v291 = vld [vmem:[#allocation7 + $0x5c] sm:$0xf]
    %v292 = vld [vmem:[#allocation7 + $0x60] sm:$0xf]
    %v293 = vld [vmem:[#allocation7 + $0x64] sm:$0xf]
    %v294 = vld [vmem:[#allocation7 + $0x68] sm:$0xf]
    %v295 = vld [vmem:[#allocation7 + $0x6c] sm:$0xf]
    %v296 = vld [vmem:[#allocation7 + $0x70] sm:$0xf]
    %v297 = vld [vmem:[#allocation7 + $0x74] sm:$0xf]
    %v298 = vld [vmem:[#allocation7 + $0x78] sm:$0xf]
    %v299 = vld [vmem:[#allocation7 + $0x7c] sm:$0xf]
    %v300 = vld [vmem:[#allocation7 + $0x80] sm:$0xf]
    %v301 = vld [vmem:[#allocation7 + $0x84] sm:$0xf]
    %v302 = vld [vmem:[#allocation7 + $0x88] sm:$0xf]
    %v303 = vld [vmem:[#allocation7 + $0x8c] sm:$0xf]
    %v304 = vld [vmem:[#allocation7 + $0x90] sm:$0xf]
    %v305 = vld [vmem:[#allocation7 + $0x94] sm:$0xf]
    %v306 = vld [vmem:[#allocation7 + $0x98] sm:$0xf]
    %v307 = vld [vmem:[#allocation7 + $0x9c] sm:$0xf]
    %v308 = vld [vmem:[#allocation7 + $0xa0] sm:$0xf]
    %v309 = vld [vmem:[#allocation7 + $0xa4] sm:$0xf]
    %v310 = vld [vmem:[#allocation7 + $0xa8] sm:$0xf]
    %v311 = vld [vmem:[#allocation7 + $0xac] sm:$0xf]
    %v312 = vld [vmem:[#allocation7 + $0xb0] sm:$0xf]
    %v313 = vld [vmem:[#allocation7 + $0xb4] sm:$0xf]
    %v314 = vld [vmem:[#allocation7 + $0xb8] sm:$0xf]
    %v315 = vld [vmem:[#allocation7 + $0xbc] sm:$0xf]
    %v316 = vld [vmem:[%s3] sm:$0x1]
    %v318 = vlaneseq
    %v319 = vshrl.u32 %v318, 7
    %v320 = vsub.s32 0, %v319
    %v321 = vrot.slane %v316, %v320
    %v371 = vunpack.c.l.b16 %v268
    %v372 = vunpack.c.l.b16 %v269
    %v373 = vunpack.c.l.b16 %v270
    %v374 = vunpack.c.l.b16 %v271
    %v375 = vunpack.c.l.b16 %v272
    %v376 = vunpack.c.l.b16 %v273
    %v377 = vunpack.c.l.b16 %v274
    %v378 = vunpack.c.l.b16 %v275
    %v379 = vunpack.c.l.b16 %v276
    %v380 = vunpack.c.l.b16 %v277
    %v381 = vunpack.c.l.b16 %v278
    %v382 = vunpack.c.l.b16 %v279
    %v383 = vunpack.c.l.b16 %v280
    %v384 = vunpack.c.l.b16 %v281
    %v385 = vunpack.c.l.b16 %v282
    %v386 = vunpack.c.l.b16 %v283
    %v387 = vunpack.c.l.b16 %v284
    %v388 = vunpack.c.l.b16 %v285
    %v389 = vunpack.c.l.b16 %v286
    %v390 = vunpack.c.l.b16 %v287
    %v391 = vunpack.c.l.b16 %v288
    %v392 = vunpack.c.l.b16 %v289
    %v393 = vunpack.c.l.b16 %v290
    %v394 = vunpack.c.l.b16 %v291
    %v395 = vunpack.c.l.b16 %v292
    %v396 = vunpack.c.l.b16 %v293
    %v397 = vunpack.c.l.b16 %v294
    %v398 = vunpack.c.l.b16 %v295
    %v399 = vunpack.c.l.b16 %v296
    %v400 = vunpack.c.l.b16 %v297
    %v401 = vunpack.c.l.b16 %v298
    %v402 = vunpack.c.l.b16 %v299
    %v403 = vunpack.c.l.b16 %v300
    %v404 = vunpack.c.l.b16 %v301
    %v405 = vunpack.c.l.b16 %v302
    %v406 = vunpack.c.l.b16 %v303
    %v407 = vunpack.c.l.b16 %v304
    %v408 = vunpack.c.l.b16 %v305
    %v409 = vunpack.c.l.b16 %v306
    %v410 = vunpack.c.l.b16 %v307
    %v411 = vunpack.c.l.b16 %v308
    %v412 = vunpack.c.l.b16 %v309
    %v413 = vunpack.c.l.b16 %v310
    %v414 = vunpack.c.l.b16 %v311
    %v415 = vunpack.c.l.b16 %v312
    %v416 = vunpack.c.l.b16 %v313
    %v417 = vunpack.c.l.b16 %v314
    %v418 = vunpack.c.l.b16 %v315
    %v419 = vpack.c.b16 %v372, %v371
    %v420 = vpack.c.b16 %v374, %v373
    %v421 = vpack.c.b16 %v376, %v375
    %v422 = vpack.c.b16 %v378, %v377
    %v423 = vpack.c.b16 %v380, %v379
    %v424 = vpack.c.b16 %v382, %v381
    %v425 = vpack.c.b16 %v384, %v383
    %v426 = vpack.c.b16 %v386, %v385
    %v427 = vpack.c.b16 %v388, %v387
    %v428 = vpack.c.b16 %v390, %v389
    %v429 = vpack.c.b16 %v392, %v391
    %v430 = vpack.c.b16 %v394, %v393
    %v431 = vpack.c.b16 %v396, %v395
    %v432 = vpack.c.b16 %v398, %v397
    %v433 = vpack.c.b16 %v400, %v399
    %v434 = vpack.c.b16 %v402, %v401
    %v435 = vpack.c.b16 %v404, %v403
    %v436 = vpack.c.b16 %v406, %v405
    %v437 = vpack.c.b16 %v408, %v407
    %v438 = vpack.c.b16 %v410, %v409
    %v439 = vpack.c.b16 %v412, %v411
    %v440 = vpack.c.b16 %v414, %v413
    %v441 = vpack.c.b16 %v416, %v415
    %v442 = vpack.c.b16 %v418, %v417
    %467 = vmatprep.subr.bf16.mxu0 0
    %468 = vmatpush1.bf16.msra.mxu0 %v419
    %469 = vmatprep.subr.bf16.mxu0 0
    %470 = vmatpush1.bf16.msra.mxu0 %v420
    %471 = vmatprep.subr.bf16.mxu0 0
    %472 = vmatpush1.bf16.msra.mxu0 %v421
    %473 = vmatprep.subr.bf16.mxu0 0
    %474 = vmatpush1.bf16.msra.mxu0 %v422
    %475 = vmatprep.subr.bf16.mxu0 0
    %476 = vmatpush1.bf16.msra.mxu0 %v423
    %477 = vmatprep.subr.bf16.mxu0 0
    %478 = vmatpush1.bf16.msra.mxu0 %v424
    %479 = vmatprep.subr.bf16.mxu0 0
    %480 = vmatpush1.bf16.msra.mxu0 %v425
    %481 = vmatprep.subr.bf16.mxu0 0
    %482 = vmatpush1.bf16.msra.mxu0 %v426
    %483 = vmatprep.subr.bf16.mxu0 0
    %484 = vmatpush1.bf16.msra.mxu0 %v427
    %485 = vmatprep.subr.bf16.mxu0 0
    %486 = vmatpush1.bf16.msra.mxu0 %v428
    %487 = vmatprep.subr.bf16.mxu0 0
    %488 = vmatpush1.bf16.msra.mxu0 %v429
    %489 = vmatprep.subr.bf16.mxu0 0
    %490 = vmatpush1.bf16.msra.mxu0 %v430
    %491 = vmatprep.subr.bf16.mxu0 0
    %492 = vmatpush1.bf16.msra.mxu0 %v431
    %493 = vmatprep.subr.bf16.mxu0 0
    %494 = vmatpush1.bf16.msra.mxu0 %v432
    %495 = vmatprep.subr.bf16.mxu0 0
    %496 = vmatpush1.bf16.msra.mxu0 %v433
    %497 = vmatprep.subr.bf16.mxu0 0
    %498 = vmatpush1.bf16.msra.mxu0 %v434
    %499 = vmatprep.mubr.bf16.mxu0 %v244
    %500 = vmatmul.mubr.bf16.gmra.mrb[0].mxu0 %v226
    %v501 = vpop.f32.mrb[0].mxu0
    %v502 = vadd.f32 %v321, %v501
    %v503 = vpop.f32.mrb[0].mxu0
    %v504 = vpop.f32.mrb[0].mxu0
    %v505 = vadd.f32 %v321, %v504
    %v506 = vpop.f32.mrb[0].mxu0
    %507 = vmatprep.mubr.bf16.mxu0 %v251
    %508 = vmatmul.mubr.bf16.gmra.mrb[0].mxu0 %v219
    %v509 = vpop.f32.mrb[0].mxu0
    %v510 = vadd.f32 %v321, %v509
    %v511 = vpop.f32.mrb[0].mxu0
    %v512 = vpop.f32.mrb[0].mxu0
    %v513 = vadd.f32 %v321, %v512
    %v514 = vpop.f32.mrb[0].mxu0
    %515 = vmatprep.mubr.bf16.mxu0 %v252
    %516 = vmatmul.mubr.bf16.gmra.mrb[0].mxu0 %v230
    %v517 = vpop.f32.mrb[0].mxu0
    %v518 = vadd.f32 %v321, %v517
    %v519 = vpop.f32.mrb[0].mxu0
    %v520 = vpop.f32.mrb[0].mxu0
    %v521 = vpop.f32.mrb[0].mxu0
    %522 = vdwg.mxu0
    %523 = vmatprep.subr.bf16.mxu0 0
    %524 = vmatpush1.bf16.msra.mxu0 %v435
    %525 = vmatprep.subr.bf16.mxu0 0
    %526 = vmatpush1.bf16.msra.mxu0 %v436
    %527 = vmatprep.subr.bf16.mxu0 0
    %528 = vmatpush1.bf16.msra.mxu0 %v437
    %529 = vmatprep.subr.bf16.mxu0 0
    %530 = vmatpush1.bf16.msra.mxu0 %v438
    %531 = vmatprep.subr.bf16.mxu0 0
    %532 = vmatpush1.bf16.msra.mxu0 %v439
    %533 = vmatprep.subr.bf16.mxu0 0
    %534 = vmatpush1.bf16.msra.mxu0 %v440
    %535 = vmatprep.subr.bf16.mxu0 0
    %536 = vmatpush1.bf16.msra.mxu0 %v441
    %537 = vmatprep.subr.bf16.mxu0 0
    %538 = vmatpush1.bf16.msra.mxu0 %v442
    %539 = vmatprep.subr.bf16.mxu0 0
    %540 = vmatpush1.bf16.msra.mxu0 0
    %541 = vmatprep.subr.bf16.mxu0 0
    %542 = vmatpush1.bf16.msra.mxu0 0
    %543 = vmatprep.subr.bf16.mxu0 0
    %544 = vmatpush1.bf16.msra.mxu0 0
    %545 = vmatprep.subr.bf16.mxu0 0
    %546 = vmatpush1.bf16.msra.mxu0 0
    %547 = vmatprep.subr.bf16.mxu0 0
    %548 = vmatpush1.bf16.msra.mxu0 0
    %549 = vmatprep.subr.bf16.mxu0 0
    %550 = vmatpush1.bf16.msra.mxu0 0
    %551 = vmatprep.subr.bf16.mxu0 0
    %552 = vmatpush1.bf16.msra.mxu0 0
    %553 = vmatprep.subr.bf16.mxu0 0
    %554 = vmatpush1.bf16.msra.mxu0 0
    %555 = vmatprep.mubr.bf16.mxu0 0
    %556 = vmatmul.mubr.bf16.gmra.mrb[0].mxu0 %v262
    %v557 = vpop.f32.mrb[0].mxu0
    %v558 = vadd.f32 %v502, %v557
    %v559 = vpop.f32.mrb[0].mxu0
    %v560 = vpop.f32.mrb[0].mxu0
    %v561 = vadd.f32 %v505, %v560
    %v562 = vpop.f32.mrb[0].mxu0
    %563 = vmatprep.mubr.bf16.mxu0 0
    %564 = vmatmul.mubr.bf16.gmra.mrb[0].mxu0 %v264
    %v565 = vpop.f32.mrb[0].mxu0
    %v566 = vadd.f32 %v510, %v565
    %v567 = vpop.f32.mrb[0].mxu0
    %v568 = vpop.f32.mrb[0].mxu0
    %v569 = vadd.f32 %v513, %v568
    %v570 = vpop.f32.mrb[0].mxu0
    %571 = vmatprep.mubr.bf16.mxu0 0
    %572 = vmatmul.mubr.bf16.gmra.mrb[0].mxu0 %v263
    %v573 = vpop.f32.mrb[0].mxu0
    %v574 = vadd.f32 %v518, %v573
    %v575 = vpop.f32.mrb[0].mxu0
    %v576 = vpop.f32.mrb[0].mxu0
    %v577 = vpop.f32.mrb[0].mxu0
    %578 = vdwg.mxu0
    %v579 = vmax.f32 %v558, 0.0
    %v580 = vmax.f32 %v561, 0.0
    %v581 = vmax.f32 %v566, 0.0
    %v582 = vmax.f32 %v569, 0.0
    %v583 = vmax.f32 %v574, 0.0
    %v584 = vlaneseq
    %v585 = vshrl.u32 %v584, 7
    %v586 = vadd.s32 %v585, 8
    %v587 = vadd.s32 %v585, 16
    %v588 = vadd.s32 %v585, 24
    %v589 = vadd.s32 %v585, 32
    %vm590 = vcmp.lt.s32.totalorder %v585, 16
    %vm591 = vcmp.lt.s32.totalorder %v586, 16
    %vm592 = vcmp.lt.s32.totalorder %v587, 16
    %vm593 = vcmp.lt.s32.totalorder %v588, 16
    %vm594 = vcmp.lt.s32.totalorder %v589, 16
    %vm595 = vcmp.ge.s32.totalorder %v585, 17
    %vm596 = vcmp.ge.s32.totalorder %v586, 17
    %vm597 = vcmp.ge.s32.totalorder %v587, 17
    %vm598 = vcmp.ge.s32.totalorder %v588, 17
    %vm599 = vcmp.ge.s32.totalorder %v589, 17
    %vm600 = vcmp.lt.s32.totalorder %v585, 33
    %vm601 = vcmp.lt.s32.totalorder %v586, 33
    %vm602 = vcmp.lt.s32.totalorder %v587, 33
    %vm603 = vcmp.lt.s32.totalorder %v588, 33
    %vm604 = vcmp.lt.s32.totalorder %v589, 33
    %vm605 = vmand %vm595, %vm600
    %vm606 = vmand %vm596, %vm601
    %vm607 = vmand %vm597, %vm602
    %vm608 = vmand %vm598, %vm603
    %vm609 = vmand %vm599, %vm604
    %vm610 = vmor %vm590, %vm605
    %vm611 = vmor %vm591, %vm606
    %vm612 = vmor %vm592, %vm607
    %vm613 = vmor %vm593, %vm608
    %vm614 = vmor %vm594, %vm609
    %v615 = vsel %vm610, 1, 0
    %v616 = vsel %vm611, 1, 0
    %v617 = vsel %vm612, 1, 0
    %v618 = vsel %vm613, 1, 0
    %v619 = vsel %vm614, 1, 0
    %vm620 = vcmp.eq.s32.totalorder %v615, 1
    %vm621 = vcmp.eq.s32.totalorder %v616, 1
    %vm622 = vcmp.eq.s32.totalorder %v617, 1
    %vm623 = vcmp.eq.s32.totalorder %v618, 1
    %vm624 = vcmp.eq.s32.totalorder %v619, 1
    %v625 = vsel %vm620, %v579, 0.0
    %v626 = vsel %vm621, %v580, 0.0
    %v627 = vsel %vm622, %v581, 0.0
    %v628 = vsel %vm623, %v582, 0.0
    %v629 = vsel %vm624, %v583, 0.0
    %v630 = vpack.c.bf16 %v626, %v625
    %v631 = vpack.c.bf16 %v628, %v627
    %v632 = vpack.c.bf16 %v629, %v629
    %v634 = vshrl.u32 %v630, 16
    %v636 = vrot.slane %v634, 7
    %v637 = vshll.u32 %v630, 16
    %v639 = vor.u32 %v636, %v637
    %v641 = vshrl.u32 %v631, 16
    %v643 = vrot.slane %v641, 7
    %v644 = vshll.u32 %v631, 16
    %v646 = vor.u32 %v643, %v644
    %v647 = vsel %vm101, %v636, %v646
    %v649 = vshll.u32 %v632, 16
    %v651 = vsel %vm101, %v643, %v649
    %v654 = vsel %vm102, 0, %v639
    %v656 = vsel %vm227, %v651, 0
    %v659 = vshrl.u32 %v654, 16
    %v661 = vshll.u32 %v654, 16
    %v663 = vrot.slane %v661, 1
    %v664 = vor.u32 %v659, %v663
    %v666 = vshll.u32 %v647, 16
    %v668 = vrot.slane %v666, 1
    %v669 = vsel %vm232, %v664, %v668
    %v670 = vshrl.u32 %v647, 16
    %v672 = vor.u32 %v670, %v668
    %v673 = vshll.u32 %v656, 16
    %v675 = vrot.slane %v673, 1
    %v676 = vsel %vm232, %v672, %v675
    %v677 = vshrl.u32 %v656, 16
    %v684 = vrot.slane %v654, 1
    %v685 = vrot.slane %v647, 1
    %v686 = vsel %vm259, %v684, %v685
    %v687 = vrot.slane %v656, 1
    %v688 = vsel %vm259, %v685, %v687
    %v692 = vld [vmem:[#allocation8] sm:$0xf]
    %v693 = vld [vmem:[#allocation8 + $0x4] sm:$0xf]
    %v694 = vld [vmem:[#allocation8 + $0x8] sm:$0xf]
    %v695 = vld [vmem:[#allocation8 + $0xc] sm:$0xf]
    %v696 = vld [vmem:[#allocation8 + $0x10] sm:$0xf]
    %v697 = vld [vmem:[#allocation8 + $0x14] sm:$0xf]
    %v698 = vld [vmem:[#allocation8 + $0x18] sm:$0xf]
    %v699 = vld [vmem:[#allocation8 + $0x1c] sm:$0xf]
    %v700 = vld [vmem:[#allocation8 + $0x20] sm:$0xf]
    %v701 = vld [vmem:[#allocation8 + $0x24] sm:$0xf]
    %v702 = vld [vmem:[#allocation8 + $0x28] sm:$0xf]
    %v703 = vld [vmem:[#allocation8 + $0x2c] sm:$0xf]
    %v704 = vld [vmem:[#allocation8 + $0x30] sm:$0xf]
    %v705 = vld [vmem:[#allocation8 + $0x34] sm:$0xf]
    %v706 = vld [vmem:[#allocation8 + $0x38] sm:$0xf]
    %v707 = vld [vmem:[#allocation8 + $0x3c] sm:$0xf]
    %v708 = vld [vmem:[#allocation8 + $0x40] sm:$0xf]
    %v709 = vld [vmem:[#allocation8 + $0x44] sm:$0xf]
    %v710 = vld [vmem:[#allocation8 + $0x48] sm:$0xf]
    %v711 = vld [vmem:[#allocation8 + $0x4c] sm:$0xf]
    %v712 = vld [vmem:[#allocation8 + $0x50] sm:$0xf]
    %v713 = vld [vmem:[#allocation8 + $0x54] sm:$0xf]
    %v714 = vld [vmem:[#allocation8 + $0x58] sm:$0xf]
    %v715 = vld [vmem:[#allocation8 + $0x5c] sm:$0xf]
    %v716 = vld [vmem:[#allocation8 + $0x60] sm:$0xf]
    %v717 = vld [vmem:[#allocation8 + $0x64] sm:$0xf]
    %v718 = vld [vmem:[#allocation8 + $0x68] sm:$0xf]
    %v719 = vld [vmem:[#allocation8 + $0x6c] sm:$0xf]
    %v720 = vld [vmem:[#allocation8 + $0x70] sm:$0xf]
    %v721 = vld [vmem:[#allocation8 + $0x74] sm:$0xf]
    %v722 = vld [vmem:[#allocation8 + $0x78] sm:$0xf]
    %v723 = vld [vmem:[#allocation8 + $0x7c] sm:$0xf]
    %v724 = vld [vmem:[#allocation8 + $0x80] sm:$0xf]
    %v725 = vld [vmem:[#allocation8 + $0x84] sm:$0xf]
    %v726 = vld [vmem:[#allocation8 + $0x88] sm:$0xf]
    %v727 = vld [vmem:[#allocation8 + $0x8c] sm:$0xf]
    %v728 = vld [vmem:[#allocation8 + $0x90] sm:$0xf]
    %v729 = vld [vmem:[#allocation8 + $0x94] sm:$0xf]
    %v730 = vld [vmem:[#allocation8 + $0x98] sm:$0xf]
    %v731 = vld [vmem:[#allocation8 + $0x9c] sm:$0xf]
    %v732 = vld [vmem:[#allocation8 + $0xa0] sm:$0xf]
    %v733 = vld [vmem:[#allocation8 + $0xa4] sm:$0xf]
    %v734 = vld [vmem:[#allocation8 + $0xa8] sm:$0xf]
    %v735 = vld [vmem:[#allocation8 + $0xac] sm:$0xf]
    %v736 = vld [vmem:[#allocation8 + $0xb0] sm:$0xf]
    %v737 = vld [vmem:[#allocation8 + $0xb4] sm:$0xf]
    %v738 = vld [vmem:[#allocation8 + $0xb8] sm:$0xf]
    %v739 = vld [vmem:[#allocation8 + $0xbc] sm:$0xf]
    %v788 = vunpack.c.l.b16 %v692
    %v789 = vunpack.c.l.b16 %v693
    %v790 = vunpack.c.l.b16 %v694
    %v791 = vunpack.c.l.b16 %v695
    %v792 = vunpack.c.l.b16 %v696
    %v793 = vunpack.c.l.b16 %v697
    %v794 = vunpack.c.l.b16 %v698
    %v795 = vunpack.c.l.b16 %v699
    %v796 = vunpack.c.l.b16 %v700
    %v797 = vunpack.c.l.b16 %v701
    %v798 = vunpack.c.l.b16 %v702
    %v799 = vunpack.c.l.b16 %v703
    %v800 = vunpack.c.l.b16 %v704
    %v801 = vunpack.c.l.b16 %v705
    %v802 = vunpack.c.l.b16 %v706
    %v803 = vunpack.c.l.b16 %v707
    %v804 = vunpack.c.l.b16 %v708
    %v805 = vunpack.c.l.b16 %v709
    %v806 = vunpack.c.l.b16 %v710
    %v807 = vunpack.c.l.b16 %v711
    %v808 = vunpack.c.l.b16 %v712
    %v809 = vunpack.c.l.b16 %v713
    %v810 = vunpack.c.l.b16 %v714
    %v811 = vunpack.c.l.b16 %v715
    %v812 = vunpack.c.l.b16 %v716
    %v813 = vunpack.c.l.b16 %v717
    %v814 = vunpack.c.l.b16 %v718
    %v815 = vunpack.c.l.b16 %v719
    %v816 = vunpack.c.l.b16 %v720
    %v817 = vunpack.c.l.b16 %v721
    %v818 = vunpack.c.l.b16 %v722
    %v819 = vunpack.c.l.b16 %v723
    %v820 = vunpack.c.l.b16 %v724
    %v821 = vunpack.c.l.b16 %v725
    %v822 = vunpack.c.l.b16 %v726
    %v823 = vunpack.c.l.b16 %v727
    %v824 = vunpack.c.l.b16 %v728
    %v825 = vunpack.c.l.b16 %v729
    %v826 = vunpack.c.l.b16 %v730
    %v827 = vunpack.c.l.b16 %v731
    %v828 = vunpack.c.l.b16 %v732
    %v829 = vunpack.c.l.b16 %v733
    %v830 = vunpack.c.l.b16 %v734
    %v831 = vunpack.c.l.b16 %v735
    %v832 = vunpack.c.l.b16 %v736
    %v833 = vunpack.c.l.b16 %v737
    %v834 = vunpack.c.l.b16 %v738
    %v835 = vunpack.c.l.b16 %v739
    %v836 = vpack.c.b16 %v789, %v788
    %v837 = vpack.c.b16 %v791, %v790
    %v838 = vpack.c.b16 %v793, %v792
    %v839 = vpack.c.b16 %v795, %v794
    %v840 = vpack.c.b16 %v797, %v796
    %v841 = vpack.c.b16 %v799, %v798
    %v842 = vpack.c.b16 %v801, %v800
    %v843 = vpack.c.b16 %v803, %v802
    %v844 = vpack.c.b16 %v805, %v804
    %v845 = vpack.c.b16 %v807, %v806
    %v846 = vpack.c.b16 %v809, %v808
    %v847 = vpack.c.b16 %v811, %v810
    %v848 = vpack.c.b16 %v813, %v812
    %v849 = vpack.c.b16 %v815, %v814
    %v850 = vpack.c.b16 %v817, %v816
    %v851 = vpack.c.b16 %v819, %v818
    %v852 = vpack.c.b16 %v821, %v820
    %v853 = vpack.c.b16 %v823, %v822
    %v854 = vpack.c.b16 %v825, %v824
    %v855 = vpack.c.b16 %v827, %v826
    %v856 = vpack.c.b16 %v829, %v828
    %v857 = vpack.c.b16 %v831, %v830
    %v858 = vpack.c.b16 %v833, %v832
    %v859 = vpack.c.b16 %v835, %v834
    %884 = vmatprep.subr.bf16.mxu0 0
    %885 = vmatpush1.bf16.msra.mxu0 %v836
    %886 = vmatprep.subr.bf16.mxu0 0
    %887 = vmatpush1.bf16.msra.mxu0 %v837
    %888 = vmatprep.subr.bf16.mxu0 0
    %889 = vmatpush1.bf16.msra.mxu0 %v838
    %890 = vmatprep.subr.bf16.mxu0 0
    %891 = vmatpush1.bf16.msra.mxu0 %v839
    %892 = vmatprep.subr.bf16.mxu0 0
    %893 = vmatpush1.bf16.msra.mxu0 %v840
    %894 = vmatprep.subr.bf16.mxu0 0
    %895 = vmatpush1.bf16.msra.mxu0 %v841
    %896 = vmatprep.subr.bf16.mxu0 0
    %897 = vmatpush1.bf16.msra.mxu0 %v842
    %898 = vmatprep.subr.bf16.mxu0 0
    %899 = vmatpush1.bf16.msra.mxu0 %v843
    %900 = vmatprep.subr.bf16.mxu0 0
    %901 = vmatpush1.bf16.msra.mxu0 %v844
    %902 = vmatprep.subr.bf16.mxu0 0
    %903 = vmatpush1.bf16.msra.mxu0 %v845
    %904 = vmatprep.subr.bf16.mxu0 0
    %905 = vmatpush1.bf16.msra.mxu0 %v846
    %906 = vmatprep.subr.bf16.mxu0 0
    %907 = vmatpush1.bf16.msra.mxu0 %v847
    %908 = vmatprep.subr.bf16.mxu0 0
    %909 = vmatpush1.bf16.msra.mxu0 %v848
    %910 = vmatprep.subr.bf16.mxu0 0
    %911 = vmatpush1.bf16.msra.mxu0 %v849
    %912 = vmatprep.subr.bf16.mxu0 0
    %913 = vmatpush1.bf16.msra.mxu0 %v850
    %914 = vmatprep.subr.bf16.mxu0 0
    %915 = vmatpush1.bf16.msra.mxu0 %v851
    %916 = vmatprep.mubr.bf16.mxu0 %v669
    %917 = vmatmul.mubr.bf16.gmra.mrb[0].mxu0 %v654
    %v918 = vpop.f32.mrb[0].mxu0
    %v919 = vadd.f32 %v181, %v918
    %v920 = vpop.f32.mrb[0].mxu0
    %v921 = vpop.f32.mrb[0].mxu0
    %v922 = vadd.f32 %v184, %v921
    %v923 = vpop.f32.mrb[0].mxu0
    %924 = vmatprep.mubr.bf16.mxu0 %v676
    %925 = vmatmul.mubr.bf16.gmra.mrb[0].mxu0 %v647
    %v926 = vpop.f32.mrb[0].mxu0
    %v927 = vadd.f32 %v189, %v926
    %v928 = vpop.f32.mrb[0].mxu0
    %v929 = vpop.f32.mrb[0].mxu0
    %v930 = vadd.f32 %v192, %v929
    %v931 = vpop.f32.mrb[0].mxu0
    %932 = vmatprep.mubr.bf16.mxu0 %v677
    %933 = vmatmul.mubr.bf16.gmra.mrb[0].mxu0 %v656
    %v934 = vpop.f32.mrb[0].mxu0
    %v935 = vadd.f32 %v197, %v934
    %v936 = vpop.f32.mrb[0].mxu0
    %v937 = vpop.f32.mrb[0].mxu0
    %v938 = vpop.f32.mrb[0].mxu0
    %939 = vdwg.mxu0
    %940 = vmatprep.subr.bf16.mxu0 0
    %941 = vmatpush1.bf16.msra.mxu0 %v852
    %942 = vmatprep.subr.bf16.mxu0 0
    %943 = vmatpush1.bf16.msra.mxu0 %v853
    %944 = vmatprep.subr.bf16.mxu0 0
    %945 = vmatpush1.bf16.msra.mxu0 %v854
    %946 = vmatprep.subr.bf16.mxu0 0
    %947 = vmatpush1.bf16.msra.mxu0 %v855
    %948 = vmatprep.subr.bf16.mxu0 0
    %949 = vmatpush1.bf16.msra.mxu0 %v856
    %950 = vmatprep.subr.bf16.mxu0 0
    %951 = vmatpush1.bf16.msra.mxu0 %v857
    %952 = vmatprep.subr.bf16.mxu0 0
    %953 = vmatpush1.bf16.msra.mxu0 %v858
    %954 = vmatprep.subr.bf16.mxu0 0
    %955 = vmatpush1.bf16.msra.mxu0 %v859
    %956 = vmatprep.subr.bf16.mxu0 0
    %957 = vmatpush1.bf16.msra.mxu0 0
    %958 = vmatprep.subr.bf16.mxu0 0
    %959 = vmatpush1.bf16.msra.mxu0 0
    %960 = vmatprep.subr.bf16.mxu0 0
    %961 = vmatpush1.bf16.msra.mxu0 0
    %962 = vmatprep.subr.bf16.mxu0 0
    %963 = vmatpush1.bf16.msra.mxu0 0
    %964 = vmatprep.subr.bf16.mxu0 0
    %965 = vmatpush1.bf16.msra.mxu0 0
    %966 = vmatprep.subr.bf16.mxu0 0
    %967 = vmatpush1.bf16.msra.mxu0 0
    %968 = vmatprep.subr.bf16.mxu0 0
    %969 = vmatpush1.bf16.msra.mxu0 0
    %970 = vmatprep.subr.bf16.mxu0 0
    %971 = vmatpush1.bf16.msra.mxu0 0
    %972 = vmatprep.mubr.bf16.mxu0 0
    %973 = vmatmul.mubr.bf16.gmra.mrb[0].mxu0 %v686
    %v974 = vpop.f32.mrb[0].mxu0
    %v975 = vadd.f32 %v919, %v974
    %v976 = vpop.f32.mrb[0].mxu0
    %v977 = vpop.f32.mrb[0].mxu0
    %v978 = vadd.f32 %v922, %v977
    %v979 = vpop.f32.mrb[0].mxu0
    %980 = vmatprep.mubr.bf16.mxu0 0
    %981 = vmatmul.mubr.bf16.gmra.mrb[0].mxu0 %v688
    %v982 = vpop.f32.mrb[0].mxu0
    %v983 = vadd.f32 %v927, %v982
    %v984 = vpop.f32.mrb[0].mxu0
    %v985 = vpop.f32.mrb[0].mxu0
    %v986 = vadd.f32 %v930, %v985
    %v987 = vpop.f32.mrb[0].mxu0
    %988 = vmatprep.mubr.bf16.mxu0 0
    %989 = vmatmul.mubr.bf16.gmra.mrb[0].mxu0 %v687
    %v990 = vpop.f32.mrb[0].mxu0
    %v991 = vadd.f32 %v935, %v990
    %v992 = vpop.f32.mrb[0].mxu0
    %v993 = vpop.f32.mrb[0].mxu0
    %v994 = vpop.f32.mrb[0].mxu0
    %995 = vdwg.mxu0
    %996 = vst [vmem:[#allocation10] sm:$0xff] %v975
    %997 = vst [vmem:[#allocation10 + $0x8] sm:$0xff] %v978
    %s998 = scalar_lea.vmem [#allocation10], 16
    %999 = vst [vmem:[%s998 - $0x1] sm:$0xfe] %v983
    %1000 = vst [vmem:[%s998 + $0x7] sm:$0xff] %v986
    %1001 = vst [vmem:[%s998 + $0xf] sm:$0x1] %v991
    // Predicated region
    $region38: #{tpu_custom_call.1} parent=1 // pred_check
      _
    $region39: #{tpu_custom_call.1} parent=1 // pred_check_branch
      %1003 = sbr.rel (0) target = $region41
    $region40: #{tpu_custom_call.1} parent=1 // pred_region
      %s1005 = ssub.s32 512, 512
      %1006 = vsyncadd [#allocation4], %s1005
      %s1007 = sshll.u32 [#allocation10], 4
      %s1008 = int_to_ptr.vmem [resolvable:$true] %s1007
      %1013 = dma.vmem_to_hbm [thread:$0]  %s1008, 512, %s5, [#allocation4], 128, 128, 8
    $region41: #{tpu_custom_call.1} parent=1 // pred_fallthru
      _
    // Predicated region
    $region42: #{tpu_custom_call.1} parent=1 // pred_check
      _
    $region43: #{tpu_custom_call.1} parent=1 // pred_check_branch
      %1015 = sbr.rel (0) target = $region45
    $region44: #{tpu_custom_call.1} parent=1 // pred_region
      %1016 = dma.done [#allocation4], 512
    $region45: #{tpu_custom_call.1} parent=1 // pred_fallthru
      _
    %1017 = vsyncpa [#allocation3], 1
    %1018 = vsyncpa [#allocation6], 1
    %1019 = vsyncpa [#allocation9], 1
    %1020 = vsyncpa [#allocation4], 1

</llo_original>
